<compile_context>
chip_gen: v5e
topology: v5e:2x2
jax: 0.10.0
libtpu: 0.0.40
codegen_flags: <defaults>
</compile_context>

<pallas_src>
import numpy as np
import jax
import jax.numpy as jnp
from jax import lax
from jax.experimental import pallas as pl
from jax.experimental.pallas import tpu as pltpu


def _vmem_budget_cap_bytes():
    """Generation-aware VMEM budget (~75% of per-core capacity)."""
    try:
        cap = int(getattr(pltpu.get_tpu_info(), "vmem_capacity_bytes", 0))
    except Exception:
        cap = 0
    if cap <= 0:
        cap = 64 << 20            # conservative default (v7x per-TC VMEM)
    return max(16 << 20, int(0.75 * cap))


def make_mring_param2img(npix,
                         n_order=1,
                         fov=160,
                         r_range=(10.0, 40.0),
                         floor_r_range=(10.0, 40.0),
                         width_range=(1.0, 40.0),
                         floor_range=(0.0, 1.0),
                         flux_range=(0.8, 1.2),
                         flux_flag=False,
                         batch_block=8):
    """Returns (forward_fn, nparams, grid_r, grid_theta)."""
    gap = 1.0 / npix
    xs = (-1.0 + gap + 2.0 * gap * np.arange(npix)).astype(np.float32)
    # torch.meshgrid(-xs, xs) uses 'ij' indexing
    grid_y, grid_x = np.meshgrid(-xs, xs, indexing="ij")
    grid_r = np.sqrt(grid_x ** 2 + grid_y ** 2).astype(np.float32)
    grid_theta = np.arctan2(grid_y, grid_x).astype(np.float32)

    half_fov = 0.5 * fov
    nparams = (5 if flux_flag else 4) + 2 * n_order
    # per-image scalar features fed to the kernel:
    #   [r, coef_ring, (s*cos(eta_k), s*sin(eta_k)) * n_order, a_pref, b_pref, coef_disk]
    nfeat = 5 + 2 * n_order

    # ---- lane-dense, padded constant grid planes ---------------------------
    P = npix * npix
    P_pad = ((P + 1023) // 1024) * 1024      # multiple of 1024 -> rows % 8 == 0
    rows = P_pad // 128
    BIG = np.float32(1.0e6)                  # padded radius -> exp() underflows to 0

    gr_flat = np.full((P_pad,), BIG, np.float32)
    gr_flat[:P] = grid_r.reshape(-1)
    gt_flat = np.zeros((P_pad,), np.float32)
    gt_flat[:P] = grid_theta.reshape(-1)

    planes = [gr_flat, gr_flat * gr_flat]    # grid_r, grid_r^2
    for k in range(n_order):
        planes.append(np.cos((k + 1.0) * gt_flat).astype(np.float32))
        planes.append(np.sin((k + 1.0) * gt_flat).astype(np.float32))
    n_planes = len(planes)                   # 2 + 2*n_order
    grids_j = jnp.asarray(np.stack(planes, 0).reshape(n_planes, rows, 128))

    plane_bytes = rows * 128 * 4
    grids_bytes = n_planes * plane_bytes

    def make_kernel(tb):
        def kernel(feat_ref, nvalid_ref, grids_ref, out_ref):
            base_img = pl.program_id(0) * tb
            # Dynamic trip count: skip padded tail images entirely.
            n_img = jnp.minimum(tb, nvalid_ref[0] - base_img)
            base_feat = base_img * nfeat

            def body(i, carry):
                fb = base_feat + i * nfeat
                r = feat_ref[fb + 0]
                coef_ring = feat_ref[fb + 1]                    # -0.5 / sigma^2
                # Re-read the constant planes per image (cheap vld; keeps
                # vreg live ranges short -> no spills at larger npix).
                diff = grids_ref[0] - r
                ring = jnp.exp(coef_ring * (diff * diff))
                if n_order > 0:
                    mod = (feat_ref[fb + 2] * grids_ref[2]
                           + feat_ref[fb + 3] * grids_ref[3])
                    for k in range(1, n_order):
                        mod = mod + (feat_ref[fb + 2 + 2 * k] * grids_ref[2 + 2 * k]
                                     + feat_ref[fb + 3 + 2 * k] * grids_ref[3 + 2 * k])
                    crescent = ring + mod * ring                # (1 + mod) * ring
                else:
                    crescent = ring
                # Stage crescent in the output block so only `disk` needs scratch.
                out_ref[i] = crescent
                a = feat_ref[fb + 2 + 2 * n_order] / jnp.sum(crescent)  # (1-floor)*flux / sum_c
                disk = jnp.exp(feat_ref[fb + 4 + 2 * n_order] * grids_ref[1])
                b = feat_ref[fb + 3 + 2 * n_order] / jnp.sum(disk)      # floor*flux / sum_d
                out_ref[i] = jnp.maximum(a * out_ref[i] + b * disk, 0.0)
                return carry

            lax.fori_loop(0, n_img, body, None)
        return kernel

    def forward(params):
        params = jnp.asarray(params, jnp.float32)
        B = int(params.shape[0])
        assert params.shape[1] == nparams

        # ---- per-image scalar features (tiny; plain JAX outside the kernel) --
        p = params
        r = r_range[0] / half_fov + p[:, 0] * (r_range[1] - r_range[0]) / half_fov
        sigma = (width_range[0] / half_fov
                 + p[:, 1] * (width_range[1] - width_range[0]) / half_fov)
        cols = [r, -0.5 / (sigma * sigma)]
        for k in range(n_order):
            s = p[:, 2 + 2 * k]
            eta = (181.0 / 180.0) * np.pi * (2.0 * p[:, 3 + 2 * k] - 1.0)
            cols.append(s * jnp.cos(eta))
            cols.append(s * jnp.sin(eta))
        if flux_flag:
            flux = flux_range[0] + (flux_range[1] - flux_range[0]) * p[:, 2 + 2 * n_order]
            floor = floor_range[0] + (floor_range[1] - floor_range[0]) * p[:, 3 + 2 * n_order]
            floor_r = (floor_r_range[0] / half_fov
                       + p[:, 4 + 2 * n_order] * (floor_r_range[1] - floor_r_range[0]) / half_fov)
        else:
            flux = jnp.ones_like(r)
            floor = floor_range[0] + (floor_range[1] - floor_range[0]) * p[:, 2 + 2 * n_order]
            floor_r = (floor_r_range[0] / half_fov
                       + p[:, 3 + 2 * n_order] * (floor_r_range[1] - floor_r_range[0]) / half_fov)
        cols.append((1.0 - floor) * flux)
        cols.append(floor * flux)
        cols.append(-0.5 / (floor_r * floor_r))
        feat_flat = jnp.stack(cols, axis=1).astype(jnp.float32).reshape(-1)   # (B*nfeat,)
        # TODO(synk): for very large B, block this SMEM operand per grid step so the
        # 1-D SMEM next_pow2 padding does not grow with batch size.
        nvalid = jnp.array([B], jnp.int32)

        # ---- batch-block size: output block ~<=2 MiB, >=2 grid steps when B>=2 ----
        tb = max(1, min(batch_block, max(1, (2 << 20) // plane_bytes), B))
        if B >= 2:
            tb = min(tb, (B + 1) // 2)     # >=2 grid steps so both TCs get work

        budget_cap = _vmem_budget_cap_bytes()

        def vmem_needed(tb_):
            # planes (worst case double-buffered on the fallback path), output block
            # double-buffered, a few planes of internal scratch, fixed margin.
            return 2 * grids_bytes + 2 * tb_ * plane_bytes + 4 * plane_bytes + (2 << 20)

        while tb > 1 and vmem_needed(tb) > budget_cap:
            tb -= 1

        n_blocks = -(-B // tb)
        B_pad = n_blocks * tb
        vmem_limit = int(min(max(vmem_needed(tb), 16 << 20), budget_cap))

        kernel = make_kernel(tb)

        def run(planes_pipeline_mode):
            if planes_pipeline_mode is None:
                planes_spec = pl.BlockSpec((n_planes, rows, 128), lambda b: (0, 0, 0))
            else:
                planes_spec = pl.BlockSpec((n_planes, rows, 128), lambda b: (0, 0, 0),
                                           pipeline_mode=planes_pipeline_mode)
            return pl.pallas_call(
                kernel,
                out_shape=jax.ShapeDtypeStruct((B_pad, rows, 128), jnp.float32),
                grid=(n_blocks,),
                in_specs=[
                    pl.BlockSpec(memory_space=pltpu.MemorySpace.SMEM),   # scalar features
                    pl.BlockSpec(memory_space=pltpu.MemorySpace.SMEM),   # valid image count
                    planes_spec,                                         # constant planes
                ],
                out_specs=pl.BlockSpec((tb, rows, 128), lambda b: (b, 0, 0)),
                compiler_params=pltpu.CompilerParams(
                    dimension_semantics=("parallel",),
                    vmem_limit_bytes=vmem_limit),
            )(feat_flat, nvalid, grids_j)

        try:
            # Constant planes never change across grid steps: single buffer.
            out = run(pl.Buffered(1))
        except Exception:
            # Fallback if this jax build rejects buffer_count=1 pipeline_mode.
            out = run(None)

        return out.reshape(B_pad, rows * 128)[:B, :P].reshape(B, npix, npix)

    return forward, nparams, grid_r, grid_theta


def _ref_forward(params, grid_r, grid_theta, *, npix, n_order, fov,
                 r_range, floor_r_range, width_range, floor_range,
                 flux_range, flux_flag):
    """Pure-numpy reference matching the PyTorch forward pass."""
    p = np.asarray(params, dtype=np.float32)
    half_fov = 0.5 * fov
    r = (r_range[0] / half_fov
         + p[:, 0, None, None] * (r_range[1] - r_range[0]) / half_fov)
    sigma = (width_range[0] / half_fov
             + p[:, 1, None, None] * (width_range[1] - width_range[0]) / half_fov)
    ring = np.exp(-0.5 * (grid_r[None] - r) ** 2 / sigma ** 2)
    S = None
    for k in range(n_order):
        s = p[:, 2 + 2 * k, None, None]
        eta = 181.0 / 180.0 * np.pi * (2.0 * p[:, 3 + 2 * k, None, None] - 1.0)
        if k == 0:
            S = 1.0 + s * np.cos(grid_theta[None] - eta)
        else:
            S = S + s * np.cos((k + 1) * grid_theta[None] - eta)
    crescent = S * ring if n_order > 0 else ring
    if flux_flag:
        flux = flux_range[0] + (flux_range[1] - flux_range[0]) * p[:, 2 + 2 * n_order, None, None]
        floor = floor_range[0] + (floor_range[1] - floor_range[0]) * p[:, 3 + 2 * n_order, None, None]
        floor_r = (floor_r_range[0] / half_fov
                   + p[:, 4 + 2 * n_order, None, None] * (floor_r_range[1] - floor_r_range[0]) / half_fov)
    else:
        floor = floor_range[0] + (floor_range[1] - floor_range[0]) * p[:, 2 + 2 * n_order, None, None]
        floor_r = (floor_r_range[0] / half_fov
                   + p[:, 3 + 2 * n_order, None, None] * (floor_r_range[1] - floor_r_range[0]) / half_fov)
    disk = 1.0 / floor_r ** 2 * np.exp(-0.5 * grid_r[None] ** 2 / floor_r ** 2)
    crescent = crescent / crescent.sum(axis=(-1, -2), keepdims=True)
    disk = disk / disk.sum(axis=(-1, -2), keepdims=True)
    out = (1.0 - floor) * crescent + floor * disk
    if flux_flag:
        out = flux * out
    return np.clip(out, 0.0, None)


if __name__ == "__main__":
    npix = 32
    cfg = dict(n_order=2, fov=160,
               r_range=(10.0, 40.0), floor_r_range=(10.0, 40.0),
               width_range=(1.0, 40.0), floor_range=(0.0, 1.0),
               flux_range=(0.8, 1.2))

    key = jax.random.PRNGKey(0)
    # Check both flux paths; second case also exercises the padded tail block (B=3).
    for flux_flag, B in ((False, 4), (True, 3)):
        forward, nparams, grid_r, grid_theta = make_mring_param2img(
            npix, flux_flag=flux_flag, **cfg)
        key, sub = jax.random.split(key)
        params = jax.random.uniform(sub, (B, nparams), dtype=jnp.float32)

        out = jax.block_until_ready(forward(params))
        ref = _ref_forward(np.asarray(params), grid_r, grid_theta,
                           npix=npix, flux_flag=flux_flag, **cfg)

        assert out.shape == (B, npix, npix)
        assert np.allclose(np.asarray(out), ref, rtol=2e-3, atol=1e-6), \
            f"mismatch vs reference (flux_flag={flux_flag})"

    print("KERNEL_OK")
</pallas_src>

<mosaic_0001>
module attributes {stable_mosaic.version = 11 : i64} {
  func.func @kernel(%arg0: i32, %arg1: memref<36xf32, #tpu.memory_space<smem>>, %arg2: memref<1xi32, #tpu.memory_space<smem>>, %arg3: memref<6x8x128xf32, #tpu.memory_space<vmem>>, %arg4: memref<2x8x128xf32, #tpu.memory_space<vmem>>) attributes {dimension_semantics = [#tpu.dimension_semantics<parallel>], iteration_bounds = array<i64: 2>, scalar_prefetch = 0 : i64, scratch_operands = 0 : i64, tpu.core_type = #tpu.core_type<tc>, window_params = [{transform_indices = @transform_0, window_bounds = array<i64: 36>}, {transform_indices = @transform_1, window_bounds = array<i64: 1>}, {pipeline_mode = #tpu.pipeline_mode<synchronous>, transform_indices = @transform_2, window_bounds = array<i64: 6, 8, 128>}, {transform_indices = @transform_3, window_bounds = array<i64: 2, 8, 128>}]} {
    %c2_i32 = arith.constant 2 : i32
    %0 = arith.muli %arg0, %c2_i32 : i32
    %c0 = arith.constant 0 : index
    %1 = memref.load %arg2[%c0] : memref<1xi32, #tpu.memory_space<smem>>
    %2 = arith.subi %1, %0 : i32
    %c2_i32_0 = arith.constant 2 : i32
    %3 = arith.minsi %c2_i32_0, %2 : i32
    %c9_i32 = arith.constant 9 : i32
    %4 = arith.muli %0, %c9_i32 : i32
    %c0_i32 = arith.constant 0 : i32
    %5 = arith.subi %3, %c0_i32 : i32
    %6 = arith.addi %c0_i32, %5 : i32
    %c1_i32 = arith.constant 1 : i32
    scf.for %arg5 = %c0_i32 to %6 step %c1_i32  : i32 {
      %c9_i32_1 = arith.constant 9 : i32
      %7 = arith.muli %arg5, %c9_i32_1 : i32
      %8 = arith.addi %4, %7 : i32
      %c0_i32_2 = arith.constant 0 : i32
      %9 = arith.addi %8, %c0_i32_2 : i32
      %10 = arith.index_cast %9 : i32 to index
      %11 = memref.load %arg1[%10] : memref<36xf32, #tpu.memory_space<smem>>
      %c1_i32_3 = arith.constant 1 : i32
      %12 = arith.addi %8, %c1_i32_3 : i32
      %13 = arith.index_cast %12 : i32 to index
      %14 = memref.load %arg1[%13] : memref<36xf32, #tpu.memory_space<smem>>
      %c0_4 = arith.constant 0 : index
      %c0_5 = arith.constant 0 : index
      %c0_6 = arith.constant 0 : index
      %15 = vector.load %arg3[%c0_4, %c0_5, %c0_6] : memref<6x8x128xf32, #tpu.memory_space<vmem>>, vector<1x8x128xf32>
      %16 = vector.shape_cast %15 : vector<1x8x128xf32> to vector<8x128xf32>
      %17 = vector.broadcast %11 : f32 to vector<8x128xf32>
      %18 = arith.subf %16, %17 : vector<8x128xf32>
      %19 = arith.mulf %18, %18 : vector<8x128xf32>
      %20 = vector.broadcast %14 : f32 to vector<8x128xf32>
      %21 = arith.mulf %20, %19 : vector<8x128xf32>
      %22 = math.exp %21 : vector<8x128xf32>
      %c2_i32_7 = arith.constant 2 : i32
      %23 = arith.addi %8, %c2_i32_7 : i32
      %24 = arith.index_cast %23 : i32 to index
      %25 = memref.load %arg1[%24] : memref<36xf32, #tpu.memory_space<smem>>
      %c2 = arith.constant 2 : index
      %c0_8 = arith.constant 0 : index
      %c0_9 = arith.constant 0 : index
      %26 = vector.load %arg3[%c2, %c0_8, %c0_9] : memref<6x8x128xf32, #tpu.memory_space<vmem>>, vector<1x8x128xf32>
      %27 = vector.shape_cast %26 : vector<1x8x128xf32> to vector<8x128xf32>
      %28 = vector.broadcast %25 : f32 to vector<8x128xf32>
      %29 = arith.mulf %28, %27 : vector<8x128xf32>
      %c3_i32 = arith.constant 3 : i32
      %30 = arith.addi %8, %c3_i32 : i32
      %31 = arith.index_cast %30 : i32 to index
      %32 = memref.load %arg1[%31] : memref<36xf32, #tpu.memory_space<smem>>
      %c3 = arith.constant 3 : index
      %c0_10 = arith.constant 0 : index
      %c0_11 = arith.constant 0 : index
      %33 = vector.load %arg3[%c3, %c0_10, %c0_11] : memref<6x8x128xf32, #tpu.memory_space<vmem>>, vector<1x8x128xf32>
      %34 = vector.shape_cast %33 : vector<1x8x128xf32> to vector<8x128xf32>
      %35 = vector.broadcast %32 : f32 to vector<8x128xf32>
      %36 = arith.mulf %35, %34 : vector<8x128xf32>
      %37 = arith.addf %29, %36 : vector<8x128xf32>
      %c2_i32_12 = arith.constant 2 : i32
      %38 = arith.addi %8, %c2_i32_12 : i32
      %c2_i32_13 = arith.constant 2 : i32
      %39 = arith.addi %38, %c2_i32_13 : i32
      %40 = arith.index_cast %39 : i32 to index
      %41 = memref.load %arg1[%40] : memref<36xf32, #tpu.memory_space<smem>>
      %c4 = arith.constant 4 : index
      %c0_14 = arith.constant 0 : index
      %c0_15 = arith.constant 0 : index
      %42 = vector.load %arg3[%c4, %c0_14, %c0_15] : memref<6x8x128xf32, #tpu.memory_space<vmem>>, vector<1x8x128xf32>
      %43 = vector.shape_cast %42 : vector<1x8x128xf32> to vector<8x128xf32>
      %44 = vector.broadcast %41 : f32 to vector<8x128xf32>
      %45 = arith.mulf %44, %43 : vector<8x128xf32>
      %c3_i32_16 = arith.constant 3 : i32
      %46 = arith.addi %8, %c3_i32_16 : i32
      %c2_i32_17 = arith.constant 2 : i32
      %47 = arith.addi %46, %c2_i32_17 : i32
      %48 = arith.index_cast %47 : i32 to index
      %49 = memref.load %arg1[%48] : memref<36xf32, #tpu.memory_space<smem>>
      %c5 = arith.constant 5 : index
      %c0_18 = arith.constant 0 : index
      %c0_19 = arith.constant 0 : index
      %50 = vector.load %arg3[%c5, %c0_18, %c0_19] : memref<6x8x128xf32, #tpu.memory_space<vmem>>, vector<1x8x128xf32>
      %51 = vector.shape_cast %50 : vector<1x8x128xf32> to vector<8x128xf32>
      %52 = vector.broadcast %49 : f32 to vector<8x128xf32>
      %53 = arith.mulf %52, %51 : vector<8x128xf32>
      %54 = arith.addf %45, %53 : vector<8x128xf32>
      %55 = arith.addf %37, %54 : vector<8x128xf32>
      %56 = arith.mulf %55, %22 : vector<8x128xf32>
      %57 = arith.addf %22, %56 : vector<8x128xf32>
      %58 = arith.index_cast %arg5 : i32 to index
      %c0_20 = arith.constant 0 : index
      %c0_21 = arith.constant 0 : index
      %59 = vector.load %arg4[%58, %c0_20, %c0_21] : memref<2x8x128xf32, #tpu.memory_space<vmem>>, vector<1x8x128xf32>
      %60 = vector.shape_cast %59 : vector<1x8x128xf32> to vector<8x128xf32>
      %61 = vector.shape_cast %57 : vector<8x128xf32> to vector<1x8x128xf32>
      tpu.vector_store %arg4[%58, %c0_20, %c0_21], %61 {strides = array<i32>} : memref<2x8x128xf32, #tpu.memory_space<vmem>>, vector<1x8x128xf32>,
      %c2_i32_22 = arith.constant 2 : i32
      %62 = arith.addi %8, %c2_i32_22 : i32
      %c4_i32 = arith.constant 4 : i32
      %63 = arith.addi %62, %c4_i32 : i32
      %64 = arith.index_cast %63 : i32 to index
      %65 = memref.load %arg1[%64] : memref<36xf32, #tpu.memory_space<smem>>
      %66 = vector.shape_cast %57 : vector<8x128xf32> to vector<1x8x128xf32>
      %cst = arith.constant dense<0.000000e+00> : vector<1xf32>
      %67 = vector.multi_reduction <add>, %66, %cst [1, 2] : vector<1x8x128xf32> to vector<1xf32>
      %68 = vector.shape_cast %67 : vector<1xf32> to vector<1x1x1xf32>
      %69 = vector.extract %68[0, 0, 0] : f32 from vector<1x1x1xf32>
      %70 = arith.divf %65, %69 : f32
      %c4_i32_23 = arith.constant 4 : i32
      %71 = arith.addi %8, %c4_i32_23 : i32
      %c4_i32_24 = arith.constant 4 : i32
      %72 = arith.addi %71, %c4_i32_24 : i32
      %73 = arith.index_cast %72 : i32 to index
      %74 = memref.load %arg1[%73] : memref<36xf32, #tpu.memory_space<smem>>
      %c1 = arith.constant 1 : index
      %c0_25 = arith.constant 0 : index
      %c0_26 = arith.constant 0 : index
      %75 = vector.load %arg3[%c1, %c0_25, %c0_26] : memref<6x8x128xf32, #tpu.memory_space<vmem>>, vector<1x8x128xf32>
      %76 = vector.shape_cast %75 : vector<1x8x128xf32> to vector<8x128xf32>
      %77 = vector.broadcast %74 : f32 to vector<8x128xf32>
      %78 = arith.mulf %77, %76 : vector<8x128xf32>
      %79 = math.exp %78 : vector<8x128xf32>
      %c3_i32_27 = arith.constant 3 : i32
      %80 = arith.addi %8, %c3_i32_27 : i32
      %c4_i32_28 = arith.constant 4 : i32
      %81 = arith.addi %80, %c4_i32_28 : i32
      %82 = arith.index_cast %81 : i32 to index
      %83 = memref.load %arg1[%82] : memref<36xf32, #tpu.memory_space<smem>>
      %84 = vector.shape_cast %79 : vector<8x128xf32> to vector<1x8x128xf32>
      %cst_29 = arith.constant dense<0.000000e+00> : vector<1xf32>
      %85 = vector.multi_reduction <add>, %84, %cst_29 [1, 2] : vector<1x8x128xf32> to vector<1xf32>
      %86 = vector.shape_cast %85 : vector<1xf32> to vector<1x1x1xf32>
      %87 = vector.extract %86[0, 0, 0] : f32 from vector<1x1x1xf32>
      %88 = arith.divf %83, %87 : f32
      %89 = arith.index_cast %arg5 : i32 to index
      %c0_30 = arith.constant 0 : index
      %c0_31 = arith.constant 0 : index
      %90 = vector.load %arg4[%89, %c0_30, %c0_31] : memref<2x8x128xf32, #tpu.memory_space<vmem>>, vector<1x8x128xf32>
      %91 = vector.shape_cast %90 : vector<1x8x128xf32> to vector<8x128xf32>
      %92 = vector.broadcast %70 : f32 to vector<8x128xf32>
      %93 = arith.mulf %92, %91 : vector<8x128xf32>
      %94 = vector.broadcast %88 : f32 to vector<8x128xf32>
      %95 = arith.mulf %94, %79 : vector<8x128xf32>
      %96 = arith.addf %93, %95 : vector<8x128xf32>
      %cst_32 = arith.constant 0.000000e+00 : f32
      %97 = vector.broadcast %cst_32 : f32 to vector<8x128xf32>
      %98 = arith.maximumf %96, %97 : vector<8x128xf32>
      %99 = arith.index_cast %arg5 : i32 to index
      %c0_33 = arith.constant 0 : index
      %c0_34 = arith.constant 0 : index
      %100 = vector.load %arg4[%99, %c0_33, %c0_34] : memref<2x8x128xf32, #tpu.memory_space<vmem>>, vector<1x8x128xf32>
      %101 = vector.shape_cast %100 : vector<1x8x128xf32> to vector<8x128xf32>
      %102 = vector.shape_cast %98 : vector<8x128xf32> to vector<1x8x128xf32>
      tpu.vector_store %arg4[%99, %c0_33, %c0_34], %102 {strides = array<i32>} : memref<2x8x128xf32, #tpu.memory_space<vmem>>, vector<1x8x128xf32>,
    }
    return
  }
  func.func @transform_0(%arg0: i32) -> i32 {
    %c0_i32 = arith.constant 0 : i32
    %c0_i32_0 = arith.constant 0 : i32
    return %c0_i32 : i32
  }
  func.func @transform_1(%arg0: i32) -> i32 {
    %c0_i32 = arith.constant 0 : i32
    %c0_i32_0 = arith.constant 0 : i32
    return %c0_i32 : i32
  }
  func.func @transform_2(%arg0: i32) -> (i32, i32, i32) {
    %c0_i32 = arith.constant 0 : i32
    %c0_i32_0 = arith.constant 0 : i32
    %c0_i32_1 = arith.constant 0 : i32
    %c0_i32_2 = arith.constant 0 : i32
    return %c0_i32, %c0_i32_0, %c0_i32_1 : i32, i32, i32
  }
  func.func @transform_3(%arg0: i32) -> (i32, i32, i32) {
    %c0_i32 = arith.constant 0 : i32
    %c0_i32_0 = arith.constant 0 : i32
    %c0_i32_1 = arith.constant 0 : i32
    return %arg0, %c0_i32, %c0_i32_0 : i32, i32, i32
  }
}

module attributes {stable_mosaic.version = 11 : i64} {
  func.func @kernel(%arg0: i32, %arg1: memref<36xf32, #tpu.memory_space<smem>>, %arg2: memref<1xi32, #tpu.memory_space<smem>>, %arg3: memref<6x8x128xf32, #tpu.memory_space<vmem>>, %arg4: memref<2x8x128xf32, #tpu.memory_space<vmem>>) attributes {dimension_semantics = [#tpu.dimension_semantics<parallel>], iteration_bounds = array<i64: 2>, scalar_prefetch = 0 : i64, scratch_operands = 0 : i64, tpu.core_type = #tpu.core_type<tc>, window_params = [{transform_indices = @transform_0, window_bounds = array<i64: 36>}, {transform_indices = @transform_1, window_bounds = array<i64: 1>}, {pipeline_mode = #tpu.pipeline_mode<synchronous>, transform_indices = @transform_2, window_bounds = array<i64: 6, 8, 128>}, {transform_indices = @transform_3, window_bounds = array<i64: 2, 8, 128>}]} {
    %c2_i32 = arith.constant 2 : i32
    %0 = arith.muli %arg0, %c2_i32 : i32
    %c0 = arith.constant 0 : index
    %1 = memref.load %arg2[%c0] : memref<1xi32, #tpu.memory_space<smem>>
    %2 = arith.subi %1, %0 : i32
    %c2_i32_0 = arith.constant 2 : i32
    %3 = arith.minsi %c2_i32_0, %2 : i32
    %c9_i32 = arith.constant 9 : i32
    %4 = arith.muli %0, %c9_i32 : i32
    %c0_i32 = arith.constant 0 : i32
    %5 = arith.subi %3, %c0_i32 : i32
    %6 = arith.addi %c0_i32, %5 : i32
    %c1_i32 = arith.constant 1 : i32
    scf.for %arg5 = %c0_i32 to %6 step %c1_i32  : i32 {
      %c9_i32_1 = arith.constant 9 : i32
      %7 = arith.muli %arg5, %c9_i32_1 : i32
      %8 = arith.addi %4, %7 : i32
      %c0_i32_2 = arith.constant 0 : i32
      %9 = arith.addi %8, %c0_i32_2 : i32
      %10 = arith.index_cast %9 : i32 to index
      %11 = memref.load %arg1[%10] : memref<36xf32, #tpu.memory_space<smem>>
      %c1_i32_3 = arith.constant 1 : i32
      %12 = arith.addi %8, %c1_i32_3 : i32
      %13 = arith.index_cast %12 : i32 to index
      %14 = memref.load %arg1[%13] : memref<36xf32, #tpu.memory_space<smem>>
      %c0_4 = arith.constant 0 : index
      %c0_5 = arith.constant 0 : index
      %c0_6 = arith.constant 0 : index
      %15 = vector.load %arg3[%c0_4, %c0_5, %c0_6] : memref<6x8x128xf32, #tpu.memory_space<vmem>>, vector<1x8x128xf32>
      %16 = vector.shape_cast %15 : vector<1x8x128xf32> to vector<8x128xf32>
      %17 = vector.broadcast %11 : f32 to vector<8x128xf32>
      %18 = arith.subf %16, %17 : vector<8x128xf32>
      %19 = arith.mulf %18, %18 : vector<8x128xf32>
      %20 = vector.broadcast %14 : f32 to vector<8x128xf32>
      %21 = arith.mulf %20, %19 : vector<8x128xf32>
      %22 = math.exp %21 : vector<8x128xf32>
      %c2_i32_7 = arith.constant 2 : i32
      %23 = arith.addi %8, %c2_i32_7 : i32
      %24 = arith.index_cast %23 : i32 to index
      %25 = memref.load %arg1[%24] : memref<36xf32, #tpu.memory_space<smem>>
      %c2 = arith.constant 2 : index
      %c0_8 = arith.constant 0 : index
      %c0_9 = arith.constant 0 : index
      %26 = vector.load %arg3[%c2, %c0_8, %c0_9] : memref<6x8x128xf32, #tpu.memory_space<vmem>>, vector<1x8x128xf32>
      %27 = vector.shape_cast %26 : vector<1x8x128xf32> to vector<8x128xf32>
      %28 = vector.broadcast %25 : f32 to vector<8x128xf32>
      %29 = arith.mulf %28, %27 : vector<8x128xf32>
      %c3_i32 = arith.constant 3 : i32
      %30 = arith.addi %8, %c3_i32 : i32
      %31 = arith.index_cast %30 : i32 to index
      %32 = memref.load %arg1[%31] : memref<36xf32, #tpu.memory_space<smem>>
      %c3 = arith.constant 3 : index
      %c0_10 = arith.constant 0 : index
      %c0_11 = arith.constant 0 : index
      %33 = vector.load %arg3[%c3, %c0_10, %c0_11] : memref<6x8x128xf32, #tpu.memory_space<vmem>>, vector<1x8x128xf32>
      %34 = vector.shape_cast %33 : vector<1x8x128xf32> to vector<8x128xf32>
      %35 = vector.broadcast %32 : f32 to vector<8x128xf32>
      %36 = arith.mulf %35, %34 : vector<8x128xf32>
      %37 = arith.addf %29, %36 : vector<8x128xf32>
      %c2_i32_12 = arith.constant 2 : i32
      %38 = arith.addi %8, %c2_i32_12 : i32
      %c2_i32_13 = arith.constant 2 : i32
      %39 = arith.addi %38, %c2_i32_13 : i32
      %40 = arith.index_cast %39 : i32 to index
      %41 = memref.load %arg1[%40] : memref<36xf32, #tpu.memory_space<smem>>
      %c4 = arith.constant 4 : index
      %c0_14 = arith.constant 0 : index
      %c0_15 = arith.constant 0 : index
      %42 = vector.load %arg3[%c4, %c0_14, %c0_15] : memref<6x8x128xf32, #tpu.memory_space<vmem>>, vector<1x8x128xf32>
      %43 = vector.shape_cast %42 : vector<1x8x128xf32> to vector<8x128xf32>
      %44 = vector.broadcast %41 : f32 to vector<8x128xf32>
      %45 = arith.mulf %44, %43 : vector<8x128xf32>
      %c3_i32_16 = arith.constant 3 : i32
      %46 = arith.addi %8, %c3_i32_16 : i32
      %c2_i32_17 = arith.constant 2 : i32
      %47 = arith.addi %46, %c2_i32_17 : i32
      %48 = arith.index_cast %47 : i32 to index
      %49 = memref.load %arg1[%48] : memref<36xf32, #tpu.memory_space<smem>>
      %c5 = arith.constant 5 : index
      %c0_18 = arith.constant 0 : index
      %c0_19 = arith.constant 0 : index
      %50 = vector.load %arg3[%c5, %c0_18, %c0_19] : memref<6x8x128xf32, #tpu.memory_space<vmem>>, vector<1x8x128xf32>
      %51 = vector.shape_cast %50 : vector<1x8x128xf32> to vector<8x128xf32>
      %52 = vector.broadcast %49 : f32 to vector<8x128xf32>
      %53 = arith.mulf %52, %51 : vector<8x128xf32>
      %54 = arith.addf %45, %53 : vector<8x128xf32>
      %55 = arith.addf %37, %54 : vector<8x128xf32>
      %56 = arith.mulf %55, %22 : vector<8x128xf32>
      %57 = arith.addf %22, %56 : vector<8x128xf32>
      %58 = arith.index_cast %arg5 : i32 to index
      %c0_20 = arith.constant 0 : index
      %c0_21 = arith.constant 0 : index
      %59 = vector.load %arg4[%58, %c0_20, %c0_21] : memref<2x8x128xf32, #tpu.memory_space<vmem>>, vector<1x8x128xf32>
      %60 = vector.shape_cast %59 : vector<1x8x128xf32> to vector<8x128xf32>
      %61 = vector.shape_cast %57 : vector<8x128xf32> to vector<1x8x128xf32>
      tpu.vector_store %arg4[%58, %c0_20, %c0_21], %61 {strides = array<i32>} : memref<2x8x128xf32, #tpu.memory_space<vmem>>, vector<1x8x128xf32>,
      %c2_i32_22 = arith.constant 2 : i32
      %62 = arith.addi %8, %c2_i32_22 : i32
      %c4_i32 = arith.constant 4 : i32
      %63 = arith.addi %62, %c4_i32 : i32
      %64 = arith.index_cast %63 : i32 to index
      %65 = memref.load %arg1[%64] : memref<36xf32, #tpu.memory_space<smem>>
      %66 = vector.shape_cast %57 : vector<8x128xf32> to vector<1x8x128xf32>
      %cst = arith.constant dense<0.000000e+00> : vector<1xf32>
      %67 = vector.multi_reduction <add>, %66, %cst [1, 2] : vector<1x8x128xf32> to vector<1xf32>
      %68 = vector.shape_cast %67 : vector<1xf32> to vector<1x1x1xf32>
      %69 = vector.extract %68[0, 0, 0] : f32 from vector<1x1x1xf32>
      %70 = arith.divf %65, %69 : f32
      %c4_i32_23 = arith.constant 4 : i32
      %71 = arith.addi %8, %c4_i32_23 : i32
      %c4_i32_24 = arith.constant 4 : i32
      %72 = arith.addi %71, %c4_i32_24 : i32
      %73 = arith.index_cast %72 : i32 to index
      %74 = memref.load %arg1[%73] : memref<36xf32, #tpu.memory_space<smem>>
      %c1 = arith.constant 1 : index
      %c0_25 = arith.constant 0 : index
      %c0_26 = arith.constant 0 : index
      %75 = vector.load %arg3[%c1, %c0_25, %c0_26] : memref<6x8x128xf32, #tpu.memory_space<vmem>>, vector<1x8x128xf32>
      %76 = vector.shape_cast %75 : vector<1x8x128xf32> to vector<8x128xf32>
      %77 = vector.broadcast %74 : f32 to vector<8x128xf32>
      %78 = arith.mulf %77, %76 : vector<8x128xf32>
      %79 = math.exp %78 : vector<8x128xf32>
      %c3_i32_27 = arith.constant 3 : i32
      %80 = arith.addi %8, %c3_i32_27 : i32
      %c4_i32_28 = arith.constant 4 : i32
      %81 = arith.addi %80, %c4_i32_28 : i32
      %82 = arith.index_cast %81 : i32 to index
      %83 = memref.load %arg1[%82] : memref<36xf32, #tpu.memory_space<smem>>
      %84 = vector.shape_cast %79 : vector<8x128xf32> to vector<1x8x128xf32>
      %cst_29 = arith.constant dense<0.000000e+00> : vector<1xf32>
      %85 = vector.multi_reduction <add>, %84, %cst_29 [1, 2] : vector<1x8x128xf32> to vector<1xf32>
      %86 = vector.shape_cast %85 : vector<1xf32> to vector<1x1x1xf32>
      %87 = vector.extract %86[0, 0, 0] : f32 from vector<1x1x1xf32>
      %88 = arith.divf %83, %87 : f32
      %89 = arith.index_cast %arg5 : i32 to index
      %c0_30 = arith.constant 0 : index
      %c0_31 = arith.constant 0 : index
      %90 = vector.load %arg4[%89, %c0_30, %c0_31] : memref<2x8x128xf32, #tpu.memory_space<vmem>>, vector<1x8x128xf32>
      %91 = vector.shape_cast %90 : vector<1x8x128xf32> to vector<8x128xf32>
      %92 = vector.broadcast %70 : f32 to vector<8x128xf32>
      %93 = arith.mulf %92, %91 : vector<8x128xf32>
      %94 = vector.broadcast %88 : f32 to vector<8x128xf32>
      %95 = arith.mulf %94, %79 : vector<8x128xf32>
      %96 = arith.addf %93, %95 : vector<8x128xf32>
      %cst_32 = arith.constant 0.000000e+00 : f32
      %97 = vector.broadcast %cst_32 : f32 to vector<8x128xf32>
      %98 = arith.maximumf %96, %97 : vector<8x128xf32>
      %99 = arith.index_cast %arg5 : i32 to index
      %c0_33 = arith.constant 0 : index
      %c0_34 = arith.constant 0 : index
      %100 = vector.load %arg4[%99, %c0_33, %c0_34] : memref<2x8x128xf32, #tpu.memory_space<vmem>>, vector<1x8x128xf32>
      %101 = vector.shape_cast %100 : vector<1x8x128xf32> to vector<8x128xf32>
      %102 = vector.shape_cast %98 : vector<8x128xf32> to vector<1x8x128xf32>
      tpu.vector_store %arg4[%99, %c0_33, %c0_34], %102 {strides = array<i32>} : memref<2x8x128xf32, #tpu.memory_space<vmem>>, vector<1x8x128xf32>,
    }
    return
  }
  func.func @transform_0(%arg0: i32) -> i32 {
    %c0_i32 = arith.constant 0 : i32
    %c0_i32_0 = arith.constant 0 : i32
    return %c0_i32 : i32
  }
  func.func @transform_1(%arg0: i32) -> i32 {
    %c0_i32 = arith.constant 0 : i32
    %c0_i32_0 = arith.constant 0 : i32
    return %c0_i32 : i32
  }
  func.func @transform_2(%arg0: i32) -> (i32, i32, i32) {
    %c0_i32 = arith.constant 0 : i32
    %c0_i32_0 = arith.constant 0 : i32
    %c0_i32_1 = arith.constant 0 : i32
    %c0_i32_2 = arith.constant 0 : i32
    return %c0_i32, %c0_i32_0, %c0_i32_1 : i32, i32, i32
  }
  func.func @transform_3(%arg0: i32) -> (i32, i32, i32) {
    %c0_i32 = arith.constant 0 : i32
    %c0_i32_0 = arith.constant 0 : i32
    %c0_i32_1 = arith.constant 0 : i32
    return %arg0, %c0_i32, %c0_i32_0 : i32, i32, i32
  }
}

</mosaic_0001>

<llo_original>
// kernel: tpu_custom_call.1
$region0: #{tpu_custom_call.1}
  #allocation0 [shape = 'u32[]', space=smem, size = 0x4, offset = 0x4, fixed_abs, tag = 'smem constant byte address 0x4 - core index']
  #allocation1 [shape = 'u32[72,128]{1,0:T(1,128)}', space=vmem, size = 0x9000, scoped, tag = 'internal scratch']
  #allocation2 [shape = 's32[1]{0:T(128)S(6)}', space=smem, size = 0x200, scoped, tag = 'scoped memory for tpu_custom_call.1']
  %s0 = inlined_call_operand.vmem [shape: f32[36], index: 0, kind: input, shape index: {}]
  %s1 = inlined_call_operand.<no memory space> [shape: s32[1], index: 1, kind: input, shape index: {}]
  %s2 = inlined_call_operand.hbm [shape: f32[6,8,128], index: 2, kind: input, shape index: {}]
  %s3 = inlined_call_operand.hbm [shape: f32[4,8,128], index: 3, kind: output, shape index: {}]
  %s4 = sld [smem:[#allocation0]]
  $region60: #{tpu_custom_call.1} parent=0
    _
  %s6 = ssub.s32 1, %s4
  %s7 = scalar_select 0, %s6, %s4
  %8 = sst [smem:[#allocation2]] %s1
  $region1: #{tpu_custom_call.1} parent=0
    #allocation3 [shape = 'u8[512]{0}', space=smem, size = 0x200, scoped, tag = 'input window, operand 0, single buffered']
    #allocation4 [shape = 's32[2]{0}', space=sflag, size = 0x8, scoped, tag = 'scoped memory for tpu_custom_call.1']
    #allocation5 [shape = 's32[2]{0}', space=sflag, size = 0x8, scoped, tag = 'scoped memory for tpu_custom_call.1']
    #allocation6 [shape = 's32[2]{0}', space=sflag, size = 0x8, scoped, tag = 'scoped memory for tpu_custom_call.1']
    #allocation7 [shape = 'u8[24576]{0}', space=vmem, size = 0x6000, scoped, tag = 'input window, operand 2, single buffered']
    #allocation8 [shape = 'u8[16384]{0}', space=vmem, size = 0x4000, scoped, tag = 'output window, operand 0']
    %9 = vsyncpa [#allocation6], 0
    %10 = vsyncpa [#allocation4], 0
    %11 = vsyncpa [#allocation5], 0
    %s12 = scalar_lea.sflag [#allocation5], 1
    %13 = vsyncpa %s12, 0
    loop: start=0, step=1, limit=4
    $region2: #{tpu_custom_call.1} parent=1 // loop_pre_header
      _
    $region3: #{tpu_custom_call.1} parent=1 // loop_header
      %s15 = sphi 0, %s19
      %p16 = scmp.ge.s32.totalorder %s15, 4
      %s23 = sphi 0, %s23
      %s25 = sphi 0, %s23
      %s26 = sphi 0, %s25
      %s40 = sphi 0, %s26
      %s44 = sphi 0, %s44
      %s46 = sphi 0, %s44
      %s47 = sphi 0, %s46
      %s61 = sphi 0, %s47
      %s65 = sphi 0, %s65
      %s67 = sphi 0, %s65
      %s68 = sphi 0, %s67
      %s82 = sphi 0, %s68
      %s88 = sphi 0, %s90
      %s91 = sphi 0, %s88
      %s92 = sphi 0, %s91
      %s108 = sphi 0, %s92
    $region4: #{tpu_custom_call.1} parent=1 // loop_header_branch
      %18 = sbr.rel (%p16) target = $region8
    $region5: #{tpu_custom_call.1} parent=1 // loop_body
      %s20 = ssub.s32 %s15, 1
      %s21 = ssub.s32 %s15, 2
      %s22 = sadd.s32 %s15, 1
      %s24 = sadd.s32 %s23, 1
      %p27 = scmp.eq.s32.totalorder %s15, 1
      %p28 = scmp.ne.s32.totalorder %s23, %s25
      %p29 = scmp.eq.s32.totalorder %s15, 0
      %p30 = por %p28, %p29
      %p31 = scmp.ne.s32.totalorder %s23, %s25
      %p32 = scmp.eq.s32.totalorder %s20, 1
      %p33 = por %p31, %p32
      %p34 = scmp.ne.s32.totalorder %s25, %s26
      %p35 = scmp.eq.s32.totalorder %s20, 0
      %p36 = por %p34, %p35
      %p37 = scmp.ne.s32.totalorder %s25, %s26
      %p38 = scmp.eq.s32.totalorder %s21, 1
      %p39 = por %p37, %p38
      %p41 = scmp.ne.s32.totalorder %s26, %s40
      %p42 = scmp.eq.s32.totalorder %s21, 0
      %p43 = por %p41, %p42
      %s45 = sadd.s32 %s44, 1
      %p48 = scmp.eq.s32.totalorder %s15, 1
      %p49 = scmp.ne.s32.totalorder %s44, %s46
      %p50 = scmp.eq.s32.totalorder %s15, 0
      %p51 = por %p49, %p50
      %p52 = scmp.ne.s32.totalorder %s44, %s46
      %p53 = scmp.eq.s32.totalorder %s20, 1
      %p54 = por %p52, %p53
      %p55 = scmp.ne.s32.totalorder %s46, %s47
      %p56 = scmp.eq.s32.totalorder %s20, 0
      %p57 = por %p55, %p56
      %p58 = scmp.ne.s32.totalorder %s46, %s47
      %p59 = scmp.eq.s32.totalorder %s21, 1
      %p60 = por %p58, %p59
      %p62 = scmp.ne.s32.totalorder %s47, %s61
      %p63 = scmp.eq.s32.totalorder %s21, 0
      %p64 = por %p62, %p63
      %s66 = sadd.s32 %s65, 1
      %p69 = scmp.eq.s32.totalorder %s15, 1
      %p70 = scmp.ne.s32.totalorder %s65, %s67
      %p71 = scmp.eq.s32.totalorder %s15, 0
      %p72 = por %p70, %p71
      %p73 = scmp.ne.s32.totalorder %s65, %s67
      %p74 = scmp.eq.s32.totalorder %s20, 1
      %p75 = por %p73, %p74
      %p76 = scmp.ne.s32.totalorder %s67, %s68
      %p77 = scmp.eq.s32.totalorder %s20, 0
      %p78 = por %p76, %p77
      %p79 = scmp.ne.s32.totalorder %s67, %s68
      %p80 = scmp.eq.s32.totalorder %s21, 1
      %p81 = por %p79, %p80
      %p83 = scmp.ne.s32.totalorder %s68, %s82
      %p84 = scmp.eq.s32.totalorder %s21, 0
      %p85 = por %p83, %p84
      %s86 = ssub.s32 %s15, %s22
      %p87 = scmp.eq.s32.totalorder %s86, 0
      %s89 = sadd.s32 %s88, 1
      %s90 = scalar_select %p87, %s88, %s89
      %p93 = pneg %p87
      %p94 = scmp.eq.s32.totalorder %s15, 1
      %p95 = por %p93, %p94
      %p96 = scmp.ne.s32.totalorder %s88, %s91
      %p97 = scmp.eq.s32.totalorder %s15, 0
      %p98 = por %p96, %p97
      %p99 = scmp.ne.s32.totalorder %s88, %s91
      %p100 = scmp.eq.s32.totalorder %s20, 1
      %p101 = por %p99, %p100
      %p102 = scmp.ne.s32.totalorder %s91, %s92
      %p103 = scmp.eq.s32.totalorder %s20, 0
      %p104 = por %p102, %p103
      %p105 = scmp.ne.s32.totalorder %s91, %s92
      %p106 = scmp.eq.s32.totalorder %s21, 1
      %p107 = por %p105, %p106
      %p109 = scmp.ne.s32.totalorder %s92, %s108
      %p110 = scmp.eq.s32.totalorder %s21, 0
      %p111 = por %p109, %p110
      %p112 = scmp.le.s32.totalorder 1, %s15
      %p113 = scmp.lt.s32.totalorder %s15, 3
      %p114 = pnand %p112, %p113
      %p115 = pneg %p114
      // Predicated region
      $region9: #{tpu_custom_call.1} parent=5 // pred_check
        _
      $region10: #{tpu_custom_call.1} parent=5 // pred_check_branch
        %117 = sbr.rel (%p114) target = $region12
      $region11: #{tpu_custom_call.1} parent=5 // pred_region
        %s118 = ssub.s32 %s15, 1
        // Predicated region
        $region13: #{tpu_custom_call.1} parent=11 // pred_check
          %p119 = pneg %p36
        $region14: #{tpu_custom_call.1} parent=11 // pred_check_branch
          %121 = sbr.rel (%p119) target = $region16
        $region15: #{tpu_custom_call.1} parent=11 // pred_region
          %123 = vsyncadd [#allocation6], 0
          %s125 = sshll.u32 %s0, 4
          %s126 = int_to_ptr.vmem [resolvable:$true] %s125
          %128 = dma.vmem_to_smem %s126, 16, [#allocation3], [#allocation6]
        $region16: #{tpu_custom_call.1} parent=11 // pred_fallthru
          _
        // Predicated region
        $region17: #{tpu_custom_call.1} parent=11 // pred_check
          %p129 = pneg %p57
        $region18: #{tpu_custom_call.1} parent=11 // pred_check_branch
          %131 = sbr.rel (%p129) target = $region20
        $region19: #{tpu_custom_call.1} parent=11 // pred_region
          _
        $region20: #{tpu_custom_call.1} parent=11 // pred_fallthru
          _
        // Predicated region
        $region21: #{tpu_custom_call.1} parent=11 // pred_check
          %p132 = pneg %p78
        $region22: #{tpu_custom_call.1} parent=11 // pred_check_branch
          %134 = sbr.rel (%p132) target = $region24
        $region23: #{tpu_custom_call.1} parent=11 // pred_region
          %136 = vsyncadd [#allocation4], 0
          %s137 = sshll.u32 %s2, 4
          %s138 = int_to_ptr.hbm [resolvable:$true] %s137
          %s139 = sshll.u32 [#allocation7], 4
          %s140 = int_to_ptr.vmem [resolvable:$true] %s139
          %145 = dma.hbm_to_vmem [thread:$0]  %s138, 768, %s140, [#allocation4], 128, 128, 8
        $region24: #{tpu_custom_call.1} parent=11 // pred_fallthru
          _
      $region12: #{tpu_custom_call.1} parent=5 // pred_fallthru
        _
      %p146 = scmp.lt.s32.totalorder %s15, 2
      // Predicated region
      $region25: #{tpu_custom_call.1} parent=5 // pred_check
        %p147 = pneg %p146
      $region26: #{tpu_custom_call.1} parent=5 // pred_check_branch
        %149 = sbr.rel (%p147) target = $region28
      $region27: #{tpu_custom_call.1} parent=5 // pred_region
        _
      $region28: #{tpu_custom_call.1} parent=5 // pred_fallthru
        _
      %p150 = scmp.le.s32.totalorder 1, %s15
      %p151 = scmp.lt.s32.totalorder %s15, 3
      %p152 = pnand %p150, %p151
      %p153 = pneg %p152
      // Predicated region
      $region29: #{tpu_custom_call.1} parent=5 // pred_check
        _
      $region30: #{tpu_custom_call.1} parent=5 // pred_check_branch
        %155 = sbr.rel (%p152) target = $region32
      $region31: #{tpu_custom_call.1} parent=5 // pred_region
        %s156 = ssub.s32 %s15, 1
        // Predicated region
        $region33: #{tpu_custom_call.1} parent=31 // pred_check
          %p157 = pneg %p36
        $region34: #{tpu_custom_call.1} parent=31 // pred_check_branch
          %159 = sbr.rel (%p157) target = $region36
        $region35: #{tpu_custom_call.1} parent=31 // pred_region
          %161 = dma.done [#allocation6], 16
        $region36: #{tpu_custom_call.1} parent=31 // pred_fallthru
          _
        // Predicated region
        $region37: #{tpu_custom_call.1} parent=31 // pred_check
          %p162 = pneg %p78
        $region38: #{tpu_custom_call.1} parent=31 // pred_check_branch
          %164 = sbr.rel (%p162) target = $region40
        $region39: #{tpu_custom_call.1} parent=31 // pred_region
          %166 = dma.done [#allocation4], 768
        $region40: #{tpu_custom_call.1} parent=31 // pred_fallthru
          _
        %167 = sfence
        %p168 = pneg %p36
        %p169 = pneg %p33
        %p170 = pneg %p57
        %p171 = pneg %p54
        %p172 = pneg %p78
        %p173 = pneg %p75
        %p174 = pneg %p104
        %p175 = pneg %p101
        %s176 = sand.u32 %s91, 1
        %s177 = scalar_lea.sflag [#allocation5], %s176
        %s178 = sand.u32 %s91, 1
        %s179 = smul.addr %s178, 16
        %s180 = scalar_lea.vmem [#allocation8], %s179
        %s181 = smul.u32 2, %s20
        %s182 = smul.u32 %s20, 2
        %s183 = sld [smem:[#allocation2]]
        %s184 = ssub.s32 %s183, %s182
        %p185 = scmp.lt.s32.totalorder %s184, 2
        %s186 = scalar_select %p185, %s184, 2
        %s187 = smul.u32 %s20, 18
        // While loop
        $region41: #{tpu_custom_call.1} parent=31 // loop_pre_header
          _
        $region42: #{tpu_custom_call.1} parent=31 // loop_header
          %s189 = sphi 0, %s191
          %p190 = scmp.ge.s32.totalorder %s189, %s186
        $region43: #{tpu_custom_call.1} parent=31 // loop_header_branch
          %193 = sbr.rel (%p190) target = $region47
        $region44: #{tpu_custom_call.1} parent=31 // loop_body
          %s194 = smul.u32 %s189, 9
          %s195 = sadd.s32 %s187, %s194
          %s196 = sld [smem:[#allocation3 + %s195]]
          %s197 = sadd.s32 %s195, 1
          %s198 = sld [smem:[#allocation3 + %s197]]
          %v199 = vld [vmem:[#allocation7] sm:$0xff]
          %v200 = vstv %s196
          %v201 = vsub.f32 %v199, %v200
          %v202 = vmul.f32 %v201, %v201
          %v203 = vstv %s198
          %v204 = vmul.f32 %v203, %v202
          %v205 = vmul.f32 %v204, 1.442695
          %v206 = vpow.pop %v205
          %s207 = sadd.s32 %s195, 2
          %s208 = sld [smem:[#allocation3 + %s207]]
          %s209 = scalar_lea.vmem [#allocation7], 16
          %v210 = vld [vmem:[%s209] sm:$0xff]
          %v211 = vstv %s208
          %v212 = vmul.f32 %v211, %v210
          %s213 = sadd.s32 %s195, 3
          %s214 = sld [smem:[#allocation3 + %s213]]
          %s215 = scalar_lea.vmem [#allocation7], 24
          %v216 = vld [vmem:[%s215] sm:$0xff]
          %v217 = vstv %s214
          %v218 = vmul.f32 %v217, %v216
          %v219 = vadd.f32 %v212, %v218
          %s220 = sadd.s32 %s195, 4
          %s221 = sld [smem:[#allocation3 + %s220]]
          %s222 = scalar_lea.vmem [#allocation7], 32
          %v223 = vld [vmem:[%s222] sm:$0xff]
          %v224 = vstv %s221
          %v225 = vmul.f32 %v224, %v223
          %s226 = sadd.s32 %s195, 5
          %s227 = sld [smem:[#allocation3 + %s226]]
          %s228 = scalar_lea.vmem [#allocation7], 40
          %v229 = vld [vmem:[%s228] sm:$0xff]
          %v230 = vstv %s227
          %v231 = vmul.f32 %v230, %v229
          %v232 = vadd.f32 %v225, %v231
          %v233 = vadd.f32 %v219, %v232
          %v234 = vmul.f32 %v233, %v206
          %v235 = vadd.f32 %v206, %v234
          %s236 = smul.u32 %s189, 8
          %s237 = scalar_lea.vmem %s180, %s236 [#allocation8]
          %238 = vst [vmem:[%s237] sm:$0xff] %v235
          %s239 = sadd.s32 %s195, 6
          %s240 = sld [smem:[#allocation3 + %s239]]
          %241 = vadd.xlane.f32.xlu0 %v235
          %v242 = vpop.xlane.xlu0 %241
          %v243 = vrot.slane %v242, 4
          %v244 = vadd.f32 %v242, %v243
          %v245 = vrot.slane %v244, 2
          %v246 = vadd.f32 %v244, %v245
          %v247 = vrot.slane %v246, 1
          %v248 = vadd.f32 %v246, %v247
          %s249 = vtos %v248
          %v250 = vstv %s249
          %v251 = vrcp.pop %v250
          %v252 = vmul.f32 %v250, %v251
          %v253 = vsub.f32 1.0, %v252
          %v254 = vmul.f32 %v251, %v253
          %v255 = vadd.f32 %v251, %v254
          %vm256 = vweird.f32 %v250
          %vm257 = vweird.f32 %v251
          %vm258 = vmor %vm256, %vm257
          %v259 = vsel %vm258, %v251, %v255
          %v260 = vand.u32 2147483647, %v250
          %vm261 = vcmp.eq.f32.partialorder %v260, 8.507059e+37
          %v262 = vand.u32 %v250, 2147483648
          %v263 = vor.u32 1.1754944e-38, %v262
          %v264 = vsel %vm261, %v263, %v259
          %s265 = vtos %v264
          %s266 = smul.f32 %s240, %s265
          %s267 = sadd.s32 %s195, 8
          %s268 = sld [smem:[#allocation3 + %s267]]
          %s269 = scalar_lea.vmem [#allocation7], 8
          %v270 = vld [vmem:[%s269] sm:$0xff]
          %v271 = vstv %s268
          %v272 = vmul.f32 %v271, %v270
          %v273 = vmul.f32 %v272, 1.442695
          %v274 = vpow.pop %v273
          %s275 = sadd.s32 %s195, 7
          %s276 = sld [smem:[#allocation3 + %s275]]
          %277 = vadd.xlane.f32.xlu0 %v274
          %v278 = vpop.xlane.xlu0 %277
          %v279 = vrot.slane %v278, 4
          %v280 = vadd.f32 %v278, %v279
          %v281 = vrot.slane %v280, 2
          %v282 = vadd.f32 %v280, %v281
          %v283 = vrot.slane %v282, 1
          %v284 = vadd.f32 %v282, %v283
          %s285 = vtos %v284
          %v286 = vstv %s285
          %v287 = vrcp.pop %v286
          %v288 = vmul.f32 %v286, %v287
          %v289 = vsub.f32 1.0, %v288
          %v290 = vmul.f32 %v287, %v289
          %v291 = vadd.f32 %v287, %v290
          %vm292 = vweird.f32 %v286
          %vm293 = vweird.f32 %v287
          %vm294 = vmor %vm292, %vm293
          %v295 = vsel %vm294, %v287, %v291
          %v296 = vand.u32 2147483647, %v286
          %vm297 = vcmp.eq.f32.partialorder %v296, 8.507059e+37
          %v298 = vand.u32 %v286, 2147483648
          %v299 = vor.u32 1.1754944e-38, %v298
          %v300 = vsel %vm297, %v299, %v295
          %s301 = vtos %v300
          %s302 = smul.f32 %s276, %s301
          %v303 = vld [vmem:[%s237] sm:$0xff]
          %v304 = vstv %s266
          %v305 = vmul.f32 %v304, %v303
          %v306 = vstv %s302
          %v307 = vmul.f32 %v306, %v274
          %v308 = vadd.f32 %v305, %v307
          %v309 = vmax.f32 %v308, 0.0
          %310 = vst [vmem:[%s237] sm:$0xff] %v309
        $region45: #{tpu_custom_call.1} parent=31 // loop_footer
          %s191 = sadd.s32 %s189, 1
        $region46: #{tpu_custom_call.1} parent=31 // loop_footer_branch
          %188 = sbr.rel target = $region42
        $region47: #{tpu_custom_call.1} parent=31 // loop_exit
          _
        %s311 = sand.u32 %s91, 1
        %s312 = scalar_lea.sflag [#allocation5], %s311
        %s313 = sand.u32 %s91, 1
        %s314 = smul.addr %s313, 16
        %s315 = scalar_lea.vmem [#allocation8], %s314
        // Predicated region
        $region48: #{tpu_custom_call.1} parent=31 // pred_check
          %p316 = pneg %p101
        $region49: #{tpu_custom_call.1} parent=31 // pred_check_branch
          %318 = sbr.rel (%p316) target = $region51
        $region50: #{tpu_custom_call.1} parent=31 // pred_region
          %s319 = smul.u32 2, %s20
          %321 = vsyncadd %s312, 0
          %s322 = smul.addr %s319, 8
          %s323 = scalar_lea.hbm %s3, %s322
          %s324 = sshll.u32 %s315, 4
          %s325 = int_to_ptr.vmem [resolvable:$true] %s324
          %s326 = sshll.u32 %s323, 4
          %s327 = int_to_ptr.hbm [resolvable:$true] %s326
          %332 = dma.vmem_to_hbm [thread:$0]  %s325, 256, %s327, %s312, 128, 128, 8
        $region51: #{tpu_custom_call.1} parent=31 // pred_fallthru
          _
      $region32: #{tpu_custom_call.1} parent=5 // pred_fallthru
        _
      %p333 = scmp.le.s32.totalorder 2, %s15
      // Predicated region
      $region52: #{tpu_custom_call.1} parent=5 // pred_check
        %p334 = pneg %p333
      $region53: #{tpu_custom_call.1} parent=5 // pred_check_branch
        %336 = sbr.rel (%p334) target = $region55
      $region54: #{tpu_custom_call.1} parent=5 // pred_region
        %s337 = ssub.s32 %s15, 2
        // Predicated region
        $region56: #{tpu_custom_call.1} parent=54 // pred_check
          %p338 = pneg %p107
        $region57: #{tpu_custom_call.1} parent=54 // pred_check_branch
          %340 = sbr.rel (%p338) target = $region59
        $region58: #{tpu_custom_call.1} parent=54 // pred_region
          %s341 = sand.u32 %s92, 1
          %s342 = scalar_lea.sflag [#allocation5], %s341
          %s343 = sand.u32 %s92, 1
          %s344 = smul.addr %s343, 16
          %s345 = scalar_lea.vmem [#allocation8], %s344
          %347 = dma.done %s342, 256
        $region59: #{tpu_custom_call.1} parent=54 // pred_fallthru
          _
      $region55: #{tpu_custom_call.1} parent=5 // pred_fallthru
        _
    $region6: #{tpu_custom_call.1} parent=1 // loop_footer
      %s19 = sadd.s32 1, %s15
    $region7: #{tpu_custom_call.1} parent=1 // loop_footer_branch
      %14 = sbr.rel target = $region3
    $region8: #{tpu_custom_call.1} parent=1 // loop_exit
      _
    %348 = vsyncpa [#allocation4], 1
    %s349 = scalar_lea.sflag [#allocation4], 1
    %350 = vsyncpa %s349, 1
    %351 = vsyncpa [#allocation5], 1
    %s352 = scalar_lea.sflag [#allocation5], 1
    %353 = vsyncpa %s352, 1
    %354 = vsyncpa [#allocation6], 1
    %s355 = scalar_lea.sflag [#allocation6], 1
    %356 = vsyncpa %s355, 1

// kernel: tpu_custom_call.1
$region0: #{tpu_custom_call.1}
  #allocation0 [shape = 'u32[]', space=smem, size = 0x4, offset = 0x4, fixed_abs, tag = 'smem constant byte address 0x4 - core index']
  #allocation1 [shape = 'u32[72,128]{1,0:T(1,128)}', space=vmem, size = 0x9000, scoped, tag = 'internal scratch']
  #allocation2 [shape = 's32[1]{0:T(128)S(6)}', space=smem, size = 0x200, scoped, tag = 'scoped memory for tpu_custom_call.1']
  %s0 = inlined_call_operand.vmem [shape: f32[36], index: 0, kind: input, shape index: {}]
  %s1 = inlined_call_operand.<no memory space> [shape: s32[1], index: 1, kind: input, shape index: {}]
  %s2 = inlined_call_operand.hbm [shape: f32[6,8,128], index: 2, kind: input, shape index: {}]
  %s3 = inlined_call_operand.hbm [shape: f32[4,8,128], index: 3, kind: output, shape index: {}]
  %s4 = sld [smem:[#allocation0]]
  $region60: #{tpu_custom_call.1} parent=0
    _
  %s6 = ssub.s32 1, %s4
  %s7 = scalar_select 0, %s6, %s4
  %8 = sst [smem:[#allocation2]] %s1
  $region1: #{tpu_custom_call.1} parent=0
    #allocation3 [shape = 'u8[512]{0}', space=smem, size = 0x200, scoped, tag = 'input window, operand 0, single buffered']
    #allocation4 [shape = 's32[2]{0}', space=sflag, size = 0x8, scoped, tag = 'scoped memory for tpu_custom_call.1']
    #allocation5 [shape = 's32[2]{0}', space=sflag, size = 0x8, scoped, tag = 'scoped memory for tpu_custom_call.1']
    #allocation6 [shape = 's32[2]{0}', space=sflag, size = 0x8, scoped, tag = 'scoped memory for tpu_custom_call.1']
    #allocation7 [shape = 'u8[24576]{0}', space=vmem, size = 0x6000, scoped, tag = 'input window, operand 2, single buffered']
    #allocation8 [shape = 'u8[16384]{0}', space=vmem, size = 0x4000, scoped, tag = 'output window, operand 0']
    %9 = vsyncpa [#allocation6], 0
    %10 = vsyncpa [#allocation4], 0
    %11 = vsyncpa [#allocation5], 0
    %s12 = scalar_lea.sflag [#allocation5], 1
    %13 = vsyncpa %s12, 0
    loop: start=0, step=1, limit=4
    $region2: #{tpu_custom_call.1} parent=1 // loop_pre_header
      _
    $region3: #{tpu_custom_call.1} parent=1 // loop_header
      %s15 = sphi 0, %s19
      %p16 = scmp.ge.s32.totalorder %s15, 4
      %s23 = sphi 0, %s23
      %s25 = sphi 0, %s23
      %s26 = sphi 0, %s25
      %s40 = sphi 0, %s26
      %s44 = sphi 0, %s44
      %s46 = sphi 0, %s44
      %s47 = sphi 0, %s46
      %s61 = sphi 0, %s47
      %s65 = sphi 0, %s65
      %s67 = sphi 0, %s65
      %s68 = sphi 0, %s67
      %s82 = sphi 0, %s68
      %s88 = sphi 0, %s90
      %s91 = sphi 0, %s88
      %s92 = sphi 0, %s91
      %s108 = sphi 0, %s92
    $region4: #{tpu_custom_call.1} parent=1 // loop_header_branch
      %18 = sbr.rel (%p16) target = $region8
    $region5: #{tpu_custom_call.1} parent=1 // loop_body
      %s20 = ssub.s32 %s15, 1
      %s21 = ssub.s32 %s15, 2
      %s22 = sadd.s32 %s15, 1
      %s24 = sadd.s32 %s23, 1
      %p27 = scmp.eq.s32.totalorder %s15, 1
      %p28 = scmp.ne.s32.totalorder %s23, %s25
      %p29 = scmp.eq.s32.totalorder %s15, 0
      %p30 = por %p28, %p29
      %p31 = scmp.ne.s32.totalorder %s23, %s25
      %p32 = scmp.eq.s32.totalorder %s20, 1
      %p33 = por %p31, %p32
      %p34 = scmp.ne.s32.totalorder %s25, %s26
      %p35 = scmp.eq.s32.totalorder %s20, 0
      %p36 = por %p34, %p35
      %p37 = scmp.ne.s32.totalorder %s25, %s26
      %p38 = scmp.eq.s32.totalorder %s21, 1
      %p39 = por %p37, %p38
      %p41 = scmp.ne.s32.totalorder %s26, %s40
      %p42 = scmp.eq.s32.totalorder %s21, 0
      %p43 = por %p41, %p42
      %s45 = sadd.s32 %s44, 1
      %p48 = scmp.eq.s32.totalorder %s15, 1
      %p49 = scmp.ne.s32.totalorder %s44, %s46
      %p50 = scmp.eq.s32.totalorder %s15, 0
      %p51 = por %p49, %p50
      %p52 = scmp.ne.s32.totalorder %s44, %s46
      %p53 = scmp.eq.s32.totalorder %s20, 1
      %p54 = por %p52, %p53
      %p55 = scmp.ne.s32.totalorder %s46, %s47
      %p56 = scmp.eq.s32.totalorder %s20, 0
      %p57 = por %p55, %p56
      %p58 = scmp.ne.s32.totalorder %s46, %s47
      %p59 = scmp.eq.s32.totalorder %s21, 1
      %p60 = por %p58, %p59
      %p62 = scmp.ne.s32.totalorder %s47, %s61
      %p63 = scmp.eq.s32.totalorder %s21, 0
      %p64 = por %p62, %p63
      %s66 = sadd.s32 %s65, 1
      %p69 = scmp.eq.s32.totalorder %s15, 1
      %p70 = scmp.ne.s32.totalorder %s65, %s67
      %p71 = scmp.eq.s32.totalorder %s15, 0
      %p72 = por %p70, %p71
      %p73 = scmp.ne.s32.totalorder %s65, %s67
      %p74 = scmp.eq.s32.totalorder %s20, 1
      %p75 = por %p73, %p74
      %p76 = scmp.ne.s32.totalorder %s67, %s68
      %p77 = scmp.eq.s32.totalorder %s20, 0
      %p78 = por %p76, %p77
      %p79 = scmp.ne.s32.totalorder %s67, %s68
      %p80 = scmp.eq.s32.totalorder %s21, 1
      %p81 = por %p79, %p80
      %p83 = scmp.ne.s32.totalorder %s68, %s82
      %p84 = scmp.eq.s32.totalorder %s21, 0
      %p85 = por %p83, %p84
      %s86 = ssub.s32 %s15, %s22
      %p87 = scmp.eq.s32.totalorder %s86, 0
      %s89 = sadd.s32 %s88, 1
      %s90 = scalar_select %p87, %s88, %s89
      %p93 = pneg %p87
      %p94 = scmp.eq.s32.totalorder %s15, 1
      %p95 = por %p93, %p94
      %p96 = scmp.ne.s32.totalorder %s88, %s91
      %p97 = scmp.eq.s32.totalorder %s15, 0
      %p98 = por %p96, %p97
      %p99 = scmp.ne.s32.totalorder %s88, %s91
      %p100 = scmp.eq.s32.totalorder %s20, 1
      %p101 = por %p99, %p100
      %p102 = scmp.ne.s32.totalorder %s91, %s92
      %p103 = scmp.eq.s32.totalorder %s20, 0
      %p104 = por %p102, %p103
      %p105 = scmp.ne.s32.totalorder %s91, %s92
      %p106 = scmp.eq.s32.totalorder %s21, 1
      %p107 = por %p105, %p106
      %p109 = scmp.ne.s32.totalorder %s92, %s108
      %p110 = scmp.eq.s32.totalorder %s21, 0
      %p111 = por %p109, %p110
      %p112 = scmp.le.s32.totalorder 1, %s15
      %p113 = scmp.lt.s32.totalorder %s15, 3
      %p114 = pnand %p112, %p113
      %p115 = pneg %p114
      // Predicated region
      $region9: #{tpu_custom_call.1} parent=5 // pred_check
        _
      $region10: #{tpu_custom_call.1} parent=5 // pred_check_branch
        %117 = sbr.rel (%p114) target = $region12
      $region11: #{tpu_custom_call.1} parent=5 // pred_region
        %s118 = ssub.s32 %s15, 1
        // Predicated region
        $region13: #{tpu_custom_call.1} parent=11 // pred_check
          %p119 = pneg %p36
        $region14: #{tpu_custom_call.1} parent=11 // pred_check_branch
          %121 = sbr.rel (%p119) target = $region16
        $region15: #{tpu_custom_call.1} parent=11 // pred_region
          %123 = vsyncadd [#allocation6], 0
          %s125 = sshll.u32 %s0, 4
          %s126 = int_to_ptr.vmem [resolvable:$true] %s125
          %128 = dma.vmem_to_smem %s126, 16, [#allocation3], [#allocation6]
        $region16: #{tpu_custom_call.1} parent=11 // pred_fallthru
          _
        // Predicated region
        $region17: #{tpu_custom_call.1} parent=11 // pred_check
          %p129 = pneg %p57
        $region18: #{tpu_custom_call.1} parent=11 // pred_check_branch
          %131 = sbr.rel (%p129) target = $region20
        $region19: #{tpu_custom_call.1} parent=11 // pred_region
          _
        $region20: #{tpu_custom_call.1} parent=11 // pred_fallthru
          _
        // Predicated region
        $region21: #{tpu_custom_call.1} parent=11 // pred_check
          %p132 = pneg %p78
        $region22: #{tpu_custom_call.1} parent=11 // pred_check_branch
          %134 = sbr.rel (%p132) target = $region24
        $region23: #{tpu_custom_call.1} parent=11 // pred_region
          %136 = vsyncadd [#allocation4], 0
          %s137 = sshll.u32 %s2, 4
          %s138 = int_to_ptr.hbm [resolvable:$true] %s137
          %s139 = sshll.u32 [#allocation7], 4
          %s140 = int_to_ptr.vmem [resolvable:$true] %s139
          %145 = dma.hbm_to_vmem [thread:$0]  %s138, 768, %s140, [#allocation4], 128, 128, 8
        $region24: #{tpu_custom_call.1} parent=11 // pred_fallthru
          _
      $region12: #{tpu_custom_call.1} parent=5 // pred_fallthru
        _
      %p146 = scmp.lt.s32.totalorder %s15, 2
      // Predicated region
      $region25: #{tpu_custom_call.1} parent=5 // pred_check
        %p147 = pneg %p146
      $region26: #{tpu_custom_call.1} parent=5 // pred_check_branch
        %149 = sbr.rel (%p147) target = $region28
      $region27: #{tpu_custom_call.1} parent=5 // pred_region
        _
      $region28: #{tpu_custom_call.1} parent=5 // pred_fallthru
        _
      %p150 = scmp.le.s32.totalorder 1, %s15
      %p151 = scmp.lt.s32.totalorder %s15, 3
      %p152 = pnand %p150, %p151
      %p153 = pneg %p152
      // Predicated region
      $region29: #{tpu_custom_call.1} parent=5 // pred_check
        _
      $region30: #{tpu_custom_call.1} parent=5 // pred_check_branch
        %155 = sbr.rel (%p152) target = $region32
      $region31: #{tpu_custom_call.1} parent=5 // pred_region
        %s156 = ssub.s32 %s15, 1
        // Predicated region
        $region33: #{tpu_custom_call.1} parent=31 // pred_check
          %p157 = pneg %p36
        $region34: #{tpu_custom_call.1} parent=31 // pred_check_branch
          %159 = sbr.rel (%p157) target = $region36
        $region35: #{tpu_custom_call.1} parent=31 // pred_region
          %161 = dma.done [#allocation6], 16
        $region36: #{tpu_custom_call.1} parent=31 // pred_fallthru
          _
        // Predicated region
        $region37: #{tpu_custom_call.1} parent=31 // pred_check
          %p162 = pneg %p78
        $region38: #{tpu_custom_call.1} parent=31 // pred_check_branch
          %164 = sbr.rel (%p162) target = $region40
        $region39: #{tpu_custom_call.1} parent=31 // pred_region
          %166 = dma.done [#allocation4], 768
        $region40: #{tpu_custom_call.1} parent=31 // pred_fallthru
          _
        %167 = sfence
        %p168 = pneg %p36
        %p169 = pneg %p33
        %p170 = pneg %p57
        %p171 = pneg %p54
        %p172 = pneg %p78
        %p173 = pneg %p75
        %p174 = pneg %p104
        %p175 = pneg %p101
        %s176 = sand.u32 %s91, 1
        %s177 = scalar_lea.sflag [#allocation5], %s176
        %s178 = sand.u32 %s91, 1
        %s179 = smul.addr %s178, 16
        %s180 = scalar_lea.vmem [#allocation8], %s179
        %s181 = smul.u32 2, %s20
        %s182 = smul.u32 %s20, 2
        %s183 = sld [smem:[#allocation2]]
        %s184 = ssub.s32 %s183, %s182
        %p185 = scmp.lt.s32.totalorder %s184, 2
        %s186 = scalar_select %p185, %s184, 2
        %s187 = smul.u32 %s20, 18
        // While loop
        $region41: #{tpu_custom_call.1} parent=31 // loop_pre_header
          _
        $region42: #{tpu_custom_call.1} parent=31 // loop_header
          %s189 = sphi 0, %s191
          %p190 = scmp.ge.s32.totalorder %s189, %s186
        $region43: #{tpu_custom_call.1} parent=31 // loop_header_branch
          %193 = sbr.rel (%p190) target = $region47
        $region44: #{tpu_custom_call.1} parent=31 // loop_body
          %s194 = smul.u32 %s189, 9
          %s195 = sadd.s32 %s187, %s194
          %s196 = sld [smem:[#allocation3 + %s195]]
          %s197 = sadd.s32 %s195, 1
          %s198 = sld [smem:[#allocation3 + %s197]]
          %v199 = vld [vmem:[#allocation7] sm:$0xff]
          %v200 = vstv %s196
          %v201 = vsub.f32 %v199, %v200
          %v202 = vmul.f32 %v201, %v201
          %v203 = vstv %s198
          %v204 = vmul.f32 %v203, %v202
          %v205 = vmul.f32 %v204, 1.442695
          %v206 = vpow.pop %v205
          %s207 = sadd.s32 %s195, 2
          %s208 = sld [smem:[#allocation3 + %s207]]
          %s209 = scalar_lea.vmem [#allocation7], 16
          %v210 = vld [vmem:[%s209] sm:$0xff]
          %v211 = vstv %s208
          %v212 = vmul.f32 %v211, %v210
          %s213 = sadd.s32 %s195, 3
          %s214 = sld [smem:[#allocation3 + %s213]]
          %s215 = scalar_lea.vmem [#allocation7], 24
          %v216 = vld [vmem:[%s215] sm:$0xff]
          %v217 = vstv %s214
          %v218 = vmul.f32 %v217, %v216
          %v219 = vadd.f32 %v212, %v218
          %s220 = sadd.s32 %s195, 4
          %s221 = sld [smem:[#allocation3 + %s220]]
          %s222 = scalar_lea.vmem [#allocation7], 32
          %v223 = vld [vmem:[%s222] sm:$0xff]
          %v224 = vstv %s221
          %v225 = vmul.f32 %v224, %v223
          %s226 = sadd.s32 %s195, 5
          %s227 = sld [smem:[#allocation3 + %s226]]
          %s228 = scalar_lea.vmem [#allocation7], 40
          %v229 = vld [vmem:[%s228] sm:$0xff]
          %v230 = vstv %s227
          %v231 = vmul.f32 %v230, %v229
          %v232 = vadd.f32 %v225, %v231
          %v233 = vadd.f32 %v219, %v232
          %v234 = vmul.f32 %v233, %v206
          %v235 = vadd.f32 %v206, %v234
          %s236 = smul.u32 %s189, 8
          %s237 = scalar_lea.vmem %s180, %s236 [#allocation8]
          %238 = vst [vmem:[%s237] sm:$0xff] %v235
          %s239 = sadd.s32 %s195, 6
          %s240 = sld [smem:[#allocation3 + %s239]]
          %241 = vadd.xlane.f32.xlu0 %v235
          %v242 = vpop.xlane.xlu0 %241
          %v243 = vrot.slane %v242, 4
          %v244 = vadd.f32 %v242, %v243
          %v245 = vrot.slane %v244, 2
          %v246 = vadd.f32 %v244, %v245
          %v247 = vrot.slane %v246, 1
          %v248 = vadd.f32 %v246, %v247
          %s249 = vtos %v248
          %v250 = vstv %s249
          %v251 = vrcp.pop %v250
          %v252 = vmul.f32 %v250, %v251
          %v253 = vsub.f32 1.0, %v252
          %v254 = vmul.f32 %v251, %v253
          %v255 = vadd.f32 %v251, %v254
          %vm256 = vweird.f32 %v250
          %vm257 = vweird.f32 %v251
          %vm258 = vmor %vm256, %vm257
          %v259 = vsel %vm258, %v251, %v255
          %v260 = vand.u32 2147483647, %v250
          %vm261 = vcmp.eq.f32.partialorder %v260, 8.507059e+37
          %v262 = vand.u32 %v250, 2147483648
          %v263 = vor.u32 1.1754944e-38, %v262
          %v264 = vsel %vm261, %v263, %v259
          %s265 = vtos %v264
          %s266 = smul.f32 %s240, %s265
          %s267 = sadd.s32 %s195, 8
          %s268 = sld [smem:[#allocation3 + %s267]]
          %s269 = scalar_lea.vmem [#allocation7], 8
          %v270 = vld [vmem:[%s269] sm:$0xff]
          %v271 = vstv %s268
          %v272 = vmul.f32 %v271, %v270
          %v273 = vmul.f32 %v272, 1.442695
          %v274 = vpow.pop %v273
          %s275 = sadd.s32 %s195, 7
          %s276 = sld [smem:[#allocation3 + %s275]]
          %277 = vadd.xlane.f32.xlu0 %v274
          %v278 = vpop.xlane.xlu0 %277
          %v279 = vrot.slane %v278, 4
          %v280 = vadd.f32 %v278, %v279
          %v281 = vrot.slane %v280, 2
          %v282 = vadd.f32 %v280, %v281
          %v283 = vrot.slane %v282, 1
          %v284 = vadd.f32 %v282, %v283
          %s285 = vtos %v284
          %v286 = vstv %s285
          %v287 = vrcp.pop %v286
          %v288 = vmul.f32 %v286, %v287
          %v289 = vsub.f32 1.0, %v288
          %v290 = vmul.f32 %v287, %v289
          %v291 = vadd.f32 %v287, %v290
          %vm292 = vweird.f32 %v286
          %vm293 = vweird.f32 %v287
          %vm294 = vmor %vm292, %vm293
          %v295 = vsel %vm294, %v287, %v291
          %v296 = vand.u32 2147483647, %v286
          %vm297 = vcmp.eq.f32.partialorder %v296, 8.507059e+37
          %v298 = vand.u32 %v286, 2147483648
          %v299 = vor.u32 1.1754944e-38, %v298
          %v300 = vsel %vm297, %v299, %v295
          %s301 = vtos %v300
          %s302 = smul.f32 %s276, %s301
          %v303 = vld [vmem:[%s237] sm:$0xff]
          %v304 = vstv %s266
          %v305 = vmul.f32 %v304, %v303
          %v306 = vstv %s302
          %v307 = vmul.f32 %v306, %v274
          %v308 = vadd.f32 %v305, %v307
          %v309 = vmax.f32 %v308, 0.0
          %310 = vst [vmem:[%s237] sm:$0xff] %v309
        $region45: #{tpu_custom_call.1} parent=31 // loop_footer
          %s191 = sadd.s32 %s189, 1
        $region46: #{tpu_custom_call.1} parent=31 // loop_footer_branch
          %188 = sbr.rel target = $region42
        $region47: #{tpu_custom_call.1} parent=31 // loop_exit
          _
        %s311 = sand.u32 %s91, 1
        %s312 = scalar_lea.sflag [#allocation5], %s311
        %s313 = sand.u32 %s91, 1
        %s314 = smul.addr %s313, 16
        %s315 = scalar_lea.vmem [#allocation8], %s314
        // Predicated region
        $region48: #{tpu_custom_call.1} parent=31 // pred_check
          %p316 = pneg %p101
        $region49: #{tpu_custom_call.1} parent=31 // pred_check_branch
          %318 = sbr.rel (%p316) target = $region51
        $region50: #{tpu_custom_call.1} parent=31 // pred_region
          %s319 = smul.u32 2, %s20
          %321 = vsyncadd %s312, 0
          %s322 = smul.addr %s319, 8
          %s323 = scalar_lea.hbm %s3, %s322
          %s324 = sshll.u32 %s315, 4
          %s325 = int_to_ptr.vmem [resolvable:$true] %s324
          %s326 = sshll.u32 %s323, 4
          %s327 = int_to_ptr.hbm [resolvable:$true] %s326
          %332 = dma.vmem_to_hbm [thread:$0]  %s325, 256, %s327, %s312, 128, 128, 8
        $region51: #{tpu_custom_call.1} parent=31 // pred_fallthru
          _
      $region32: #{tpu_custom_call.1} parent=5 // pred_fallthru
        _
      %p333 = scmp.le.s32.totalorder 2, %s15
      // Predicated region
      $region52: #{tpu_custom_call.1} parent=5 // pred_check
        %p334 = pneg %p333
      $region53: #{tpu_custom_call.1} parent=5 // pred_check_branch
        %336 = sbr.rel (%p334) target = $region55
      $region54: #{tpu_custom_call.1} parent=5 // pred_region
        %s337 = ssub.s32 %s15, 2
        // Predicated region
        $region56: #{tpu_custom_call.1} parent=54 // pred_check
          %p338 = pneg %p107
        $region57: #{tpu_custom_call.1} parent=54 // pred_check_branch
          %340 = sbr.rel (%p338) target = $region59
        $region58: #{tpu_custom_call.1} parent=54 // pred_region
          %s341 = sand.u32 %s92, 1
          %s342 = scalar_lea.sflag [#allocation5], %s341
          %s343 = sand.u32 %s92, 1
          %s344 = smul.addr %s343, 16
          %s345 = scalar_lea.vmem [#allocation8], %s344
          %347 = dma.done %s342, 256
        $region59: #{tpu_custom_call.1} parent=54 // pred_fallthru
          _
      $region55: #{tpu_custom_call.1} parent=5 // pred_fallthru
        _
    $region6: #{tpu_custom_call.1} parent=1 // loop_footer
      %s19 = sadd.s32 1, %s15
    $region7: #{tpu_custom_call.1} parent=1 // loop_footer_branch
      %14 = sbr.rel target = $region3
    $region8: #{tpu_custom_call.1} parent=1 // loop_exit
      _
    %348 = vsyncpa [#allocation4], 1
    %s349 = scalar_lea.sflag [#allocation4], 1
    %350 = vsyncpa %s349, 1
    %351 = vsyncpa [#allocation5], 1
    %s352 = scalar_lea.sflag [#allocation5], 1
    %353 = vsyncpa %s352, 1
    %354 = vsyncpa [#allocation6], 1
    %s355 = scalar_lea.sflag [#allocation6], 1
    %356 = vsyncpa %s355, 1

</llo_original>
